<compile_context>
chip_gen: v7x
topology: tpu7x:2x2x1
jax: 0.10.0
libtpu: 0.0.40
codegen_flags: <defaults>
</compile_context>

<pallas_src>
import numpy as np
import jax
import jax.numpy as jnp
from jax.experimental import pallas as pl
from jax.experimental.pallas import tpu as pltpu


def _round_up(n, m):
    return ((n + m - 1) // m) * m


def _vmem_limit_bytes():
    """Generation-aware scoped-VMEM limit: v5e/v6e have 128 MiB physical VMEM so a
    96 MiB scoped limit is safe and lets TB grow; v7x (64 MiB physical) and unknown
    chips stay at a conservative 32 MiB."""
    try:
        cap = int(getattr(pltpu.get_tpu_info(), "vmem_capacity_bytes", 0) or 0)
    except Exception:
        cap = 0
    if cap >= 128 * 1024 * 1024:
        return 96 * 1024 * 1024
    return 32 * 1024 * 1024


def _pick_tb(B, candidates, step_bytes, budget):
    """Largest batch-block TB (divisor of B, pre-filtered for sublane alignment)
    whose per-step VMEM footprint fits `budget`.  Prefers >= 2 grid steps (v7x has
    2 TensorCores and dimension_semantics=("parallel",) shards across them) as long
    as the per-step block stays >= ~2 MiB, so 1-TC v5e/v6e are not charged extra
    per-step overhead on small problems."""
    fitting = [tb for tb in candidates if step_bytes(tb) <= budget]
    if not fitting:
        # TODO(synk): for very large C*H*W add a second "arbitrary" grid axis over HW
        # with flash-style running (m, s, kxy) accumulators instead of letting one
        # batch element blow the VMEM budget (matters most on v7x's 64 MiB VMEM).
        return min(candidates)
    tb = max(fitting)
    multi = [c for c in fitting if B // c >= 2]
    if multi:
        tb_multi = max(multi)
        if step_bytes(tb_multi) >= (2 << 20):
            tb = tb_multi
    return tb


def _make_conv_kernel(K, TB, HW, HWp):
    def kernel(x_ref, w_ref, b_ref, pos_ref, o_ref):
        # x_ref: (C, TB*HWp)   w_ref: (K, C)   b_ref: (K, 1)
        # pos_ref: (HWp, 3) = [pos_x | pos_y | 1], zero rows at padded positions
        # o_ref: (K, TB, 2)
        x_blk = x_ref[...]
        # 1x1 conv over the whole batch block as ONE wide MXU matmul: the (K, C)
        # weights stay resident while N = TB*HWp lanes stream through.  Single
        # (K, 1) bias broadcast per step.
        h = jnp.dot(w_ref[...].astype(x_blk.dtype), x_blk,
                    preferred_element_type=jnp.float32) + b_ref[...]      # (K, TB*HWp) f32
        # View per batch element for the row-wise softmax (HWp % 128 == 0 keeps the
        # lane split cheap).
        h3 = h.reshape(K, TB, HWp)
        hv = h3 if HWp == HW else h3[:, :, :HW]       # exclude padded lanes from max
        m = jnp.max(hv, axis=-1, keepdims=True)       # (K, TB, 1) per-(k, b) max
        e = jnp.exp(h3 - m)                           # (K, TB, HWp) unnormalized softmax
        # [kx, ky, denom] in a single MXU pass: the ones column of pos_ref folds the
        # softmax denominator into the same matmul; zero pos rows drop padded lanes.
        kxys = jnp.dot(e.reshape(K * TB, HWp), pos_ref[...],
                       preferred_element_type=jnp.float32)                # (K*TB, 3)
        # Exact divide of a tiny (K*TB, 2) tile (pl.reciprocal(approx=True) would be
        # marginally cheaper but loosens tolerance for no measurable gain here).
        res = kxys[:, 0:2] / kxys[:, 2:3]
        # TODO(synk): lane-dense (TB, 2, K) output packing would give unmasked stores;
        # output bytes are tiny so the (K, TB, 2) layout is kept for lowering safety.
        o_ref[...] = res.reshape(K, TB, 2)
    return kernel


def _noconv_kernel(x_ref, pos_ref, o_ref):
    # num_kp == in_c: torch skips the conv.  x_ref: (TB*K, HW) rows are exactly
    # torch's view(-1, H*W) rows (b-major), in the input's native dtype.
    h = x_ref[...]
    m = jnp.max(h, axis=-1, keepdims=True)
    e = jnp.exp((h - m).astype(jnp.float32))
    kxys = jnp.dot(e, pos_ref[...], preferred_element_type=jnp.float32)   # (TB*K, 3)
    o_ref[...] = kxys[:, 0:2] / kxys[:, 2:3]


def spatial_softmax(x, weight, bias, pos_x, pos_y, *, num_kp, in_c, in_h, in_w):
    """x: (B, C, H, W) NCHW (f32 or bf16). Returns (B, 2*num_kp) f32 (torch layout)."""
    B, C, H, W = x.shape
    assert C == in_c and H == in_h and W == in_w
    HW = H * W
    K = in_c if num_kp is None else num_kp
    apply_conv = (K != in_c)

    vmem_limit = _vmem_limit_bytes()
    budget = (vmem_limit * 3) // 4
    itemsize = x.dtype.itemsize

    # pos augmented with a ones column so e @ pos_aug yields [kx, ky, denom] in one
    # MXU pass.  Replicates the module's exact flat buffers (see header note).
    pos_aug = jnp.stack([pos_x.reshape(HW).astype(jnp.float32),
                         pos_y.reshape(HW).astype(jnp.float32),
                         jnp.ones((HW,), jnp.float32)], axis=1)           # (HW, 3)

    params = pltpu.CompilerParams(dimension_semantics=("parallel",),
                                  vmem_limit_bytes=vmem_limit)

    if apply_conv:
        HWp = _round_up(HW, 128)
        # TB candidates: divisors of B whose derived blocks obey the (8, 128) rule
        # (output block second-minor is TB -> TB % 8 == 0 unless TB == B).
        cands = [tb for tb in range(1, B + 1)
                 if B % tb == 0 and (tb == B or tb % 8 == 0)]

        def step_bytes(tb):  # double-buffered x block + f32 h/e temporaries
            return 2 * C * tb * HWp * itemsize + 3 * K * tb * HWp * 4

        TB = _pick_tb(B, cands, step_bytes, budget)

        # Layout plumbing for the wide matmul: x -> (C, B*HWp), kept in its native
        # dtype (no forced f32 cast).  Spatial padding (if any) is masked out via the
        # zero pos rows and excluded from the max inside the kernel.
        # TODO(synk): have the upstream producer emit the (C, B*HW) layout directly to
        # avoid the one-time HBM transpose XLA performs here.
        x_t = jnp.transpose(x.reshape(B, C, HW), (1, 0, 2))               # (C, B, HW)
        if HWp != HW:
            x_t = jnp.pad(x_t, ((0, 0), (0, 0), (0, HWp - HW)))
            pos_k = jnp.pad(pos_aug, ((0, HWp - HW), (0, 0)))             # zero rows
        else:
            pos_k = pos_aug
        x_t = x_t.reshape(C, B * HWp)
        w = weight.reshape(K, C).astype(x.dtype)
        b = bias.reshape(K, 1).astype(jnp.float32)

        out = pl.pallas_call(
            _make_conv_kernel(K, TB, HW, HWp),
            out_shape=jax.ShapeDtypeStruct((K, B, 2), jnp.float32),
            grid_spec=pltpu.PrefetchScalarGridSpec(
                num_scalar_prefetch=0,
                grid=(B // TB,),
                in_specs=[
                    pl.BlockSpec((C, TB * HWp), lambda i: (0, i)),
                    pl.BlockSpec((K, C), lambda i: (0, 0)),
                    pl.BlockSpec((K, 1), lambda i: (0, 0)),
                    pl.BlockSpec((HWp, 3), lambda i: (0, 0)),
                ],
                out_specs=pl.BlockSpec((K, TB, 2), lambda i: (0, i, 0)),
            ),
            compiler_params=params,
        )(x_t, w, b, pos_k)
        kxy = jnp.transpose(out, (1, 2, 0))                               # (B, 2, K)
    else:
        # Default path (num_kp is None in the module): no conv; x viewed as (B*K, HW)
        # exactly like torch's view(-1, H*W) — a free reshape, no transpose, no cast.
        cands = [tb for tb in range(1, B + 1)
                 if B % tb == 0 and (tb == B or (tb * K) % 8 == 0)]

        def step_bytes(tb):
            return 2 * tb * K * HW * itemsize + 2 * tb * K * HW * 4

        TB = _pick_tb(B, cands, step_bytes, budget)
        rows = TB * K

        out = pl.pallas_call(
            _noconv_kernel,
            out_shape=jax.ShapeDtypeStruct((B * K, 2), jnp.float32),
            grid_spec=pltpu.PrefetchScalarGridSpec(
                num_scalar_prefetch=0,
                grid=(B // TB,),
                in_specs=[
                    pl.BlockSpec((rows, HW), lambda i: (i, 0)),
                    pl.BlockSpec((HW, 3), lambda i: (0, 0)),
                ],
                out_specs=pl.BlockSpec((rows, 2), lambda i: (i, 0)),
            ),
            compiler_params=params,
        )(x.reshape(B * K, HW), pos_aug)
        kxy = jnp.transpose(out.reshape(B, K, 2), (0, 2, 1))              # (B, 2, K)

    # torch layout: cat([kx (B,K), ky (B,K)], dim=1) == (B, 2, K).reshape(B, 2K).
    return kxy.reshape(B, 2 * K)


def make_pos_buffers(in_h, in_w):
    """Replicates the torch buffer construction exactly (torch.meshgrid default
    indexing='ij' on the (W, H) linspaces, flattened to (1, W*H))."""
    xw = np.linspace(-1, 1, in_w).astype(np.float32)
    yh = np.linspace(-1, 1, in_h).astype(np.float32)
    px, py = np.meshgrid(xw, yh, indexing="ij")        # (in_w, in_h) each
    pos_x = jnp.asarray(px.reshape(1, in_w * in_h))
    pos_y = jnp.asarray(py.reshape(1, in_w * in_h))
    return pos_x, pos_y


def reference_spatial_softmax(x, weight, bias, pos_x, pos_y, *, num_kp, in_c, in_h, in_w):
    B = x.shape[0]
    h = x
    if num_kp != in_c:
        h = jnp.einsum("bchw,kc->bkhw", x, weight.reshape(num_kp, in_c)) + \
            bias.reshape(1, num_kp, 1, 1)
    h = h.reshape(-1, in_h * in_w)
    attn = jax.nn.softmax(h, axis=-1)
    kx = jnp.sum(pos_x * attn, axis=1).reshape(B, num_kp)
    ky = jnp.sum(pos_y * attn, axis=1).reshape(B, num_kp)
    return jnp.concatenate([kx, ky], axis=1)


if __name__ == "__main__":
    # Small shapes consistent with the module.
    B, in_c, in_h, in_w, num_kp = 2, 4, 16, 16, 8

    key = jax.random.PRNGKey(0)
    kx_, kw_, kb_ = jax.random.split(key, 3)

    x = jax.random.normal(kx_, (B, in_c, in_h, in_w), dtype=jnp.float32)

    # Deterministic synthetic conv parameters (Conv2d(in_c, num_kp, kernel_size=1)).
    fan_in = in_c  # kernel_size = 1
    bound = 1.0 / np.sqrt(fan_in)
    weight = jax.random.uniform(kw_, (num_kp, in_c, 1, 1), jnp.float32, -bound, bound)
    bias = jax.random.uniform(kb_, (num_kp,), jnp.float32, -bound, bound)

    pos_x, pos_y = make_pos_buffers(in_h, in_w)

    # Path 1: num_kp != in_c -> fused 1x1-conv + spatial-softmax kernel.
    out = spatial_softmax(x, weight, bias, pos_x, pos_y,
                          num_kp=num_kp, in_c=in_c, in_h=in_h, in_w=in_w)
    out = jax.block_until_ready(out)
    ref = reference_spatial_softmax(x, weight, bias, pos_x, pos_y,
                                    num_kp=num_kp, in_c=in_c, in_h=in_h, in_w=in_w)
    assert out.shape == (B, 2 * num_kp)
    np.testing.assert_allclose(np.asarray(out), np.asarray(ref), atol=1e-5, rtol=1e-4)

    # Path 2: num_kp == in_c -> torch skips the conv; conv-free kernel, free reshape.
    out2 = spatial_softmax(x, None, None, pos_x, pos_y,
                           num_kp=in_c, in_c=in_c, in_h=in_h, in_w=in_w)
    out2 = jax.block_until_ready(out2)
    ref2 = reference_spatial_softmax(x, None, None, pos_x, pos_y,
                                     num_kp=in_c, in_c=in_c, in_h=in_h, in_w=in_w)
    assert out2.shape == (B, 2 * in_c)
    np.testing.assert_allclose(np.asarray(out2), np.asarray(ref2), atol=1e-5, rtol=1e-4)

    print("KERNEL_OK")
</pallas_src>

<mosaic_0001>
module attributes {stable_mosaic.version = 11 : i64} {
  func.func @kernel(%arg0: i32, %arg1: memref<4x512xf32, #tpu.memory_space<vmem>>, %arg2: memref<8x4xf32, #tpu.memory_space<vmem>>, %arg3: memref<8x1xf32, #tpu.memory_space<vmem>>, %arg4: memref<256x3xf32, #tpu.memory_space<vmem>>, %arg5: memref<8x2x2xf32, #tpu.memory_space<vmem>>) attributes {dimension_semantics = [#tpu.dimension_semantics<parallel>], iteration_bounds = array<i64: 1>, scalar_prefetch = 0 : i64, scratch_operands = 0 : i64, tpu.core_type = #tpu.core_type<tc>, window_params = [{transform_indices = @transform_0, window_bounds = array<i64: 4, 512>}, {pipeline_mode = #tpu.pipeline_mode<synchronous>, transform_indices = @transform_1, window_bounds = array<i64: 8, 4>}, {pipeline_mode = #tpu.pipeline_mode<synchronous>, transform_indices = @transform_2, window_bounds = array<i64: 8, 1>}, {pipeline_mode = #tpu.pipeline_mode<synchronous>, transform_indices = @transform_3, window_bounds = array<i64: 256, 3>}, {transform_indices = @transform_4, window_bounds = array<i64: 8, 2, 2>}]} {
    %c0 = arith.constant 0 : index
    %c0_0 = arith.constant 0 : index
    %0 = vector.load %arg1[%c0, %c0_0] : memref<4x512xf32, #tpu.memory_space<vmem>>, vector<4x512xf32>
    %c0_1 = arith.constant 0 : index
    %c0_2 = arith.constant 0 : index
    %1 = vector.load %arg2[%c0_1, %c0_2] : memref<8x4xf32, #tpu.memory_space<vmem>>, vector<8x4xf32>
    %cst = arith.constant dense<0.000000e+00> : vector<8x512xf32>
    %2 = tpu.matmul %1, %0, %cst {dimension_numbers = #tpu.dot_dimension_numbers<[1], [0], [0], [1], [0, 0, 1, 1], [], []>} : vector<8x4xf32>, vector<4x512xf32>, vector<8x512xf32> -> vector<8x512xf32>
    %c0_3 = arith.constant 0 : index
    %c0_4 = arith.constant 0 : index
    %3 = vector.load %arg3[%c0_3, %c0_4] : memref<8x1xf32, #tpu.memory_space<vmem>>, vector<8x1xf32>
    %4 = vector.broadcast %3 : vector<8x1xf32> to vector<8x512xf32>
    %5 = arith.addf %2, %4 : vector<8x512xf32>
    %6 = vector.shape_cast %5 : vector<8x512xf32> to vector<8x2x256xf32>
    %cst_5 = arith.constant dense<0xFF800000> : vector<8x2xf32>
    %7 = vector.multi_reduction <maximumf>, %6, %cst_5 [2] : vector<8x2x256xf32> to vector<8x2xf32>
    %8 = vector.shape_cast %7 : vector<8x2xf32> to vector<8x2x1xf32>
    %9 = vector.broadcast %8 : vector<8x2x1xf32> to vector<8x2x256xf32>
    %10 = arith.subf %6, %9 : vector<8x2x256xf32>
    %11 = math.exp %10 : vector<8x2x256xf32>
    %12 = vector.shape_cast %11 : vector<8x2x256xf32> to vector<16x256xf32>
    %c0_6 = arith.constant 0 : index
    %c0_7 = arith.constant 0 : index
    %13 = vector.load %arg4[%c0_6, %c0_7] : memref<256x3xf32, #tpu.memory_space<vmem>>, vector<256x3xf32>
    %cst_8 = arith.constant dense<0.000000e+00> : vector<16x3xf32>
    %14 = tpu.matmul %12, %13, %cst_8 {dimension_numbers = #tpu.dot_dimension_numbers<[1], [0], [0], [1], [0, 0, 1, 1], [], []>} : vector<16x256xf32>, vector<256x3xf32>, vector<16x3xf32> -> vector<16x3xf32>
    %15 = vector.extract_strided_slice %14 {offsets = [0, 0], sizes = [16, 2], strides = [1, 1]} : vector<16x3xf32> to vector<16x2xf32>
    %16 = vector.extract_strided_slice %14 {offsets = [0, 2], sizes = [16, 1], strides = [1, 1]} : vector<16x3xf32> to vector<16x1xf32>
    %17 = vector.broadcast %16 : vector<16x1xf32> to vector<16x2xf32>
    %18 = arith.divf %15, %17 : vector<16x2xf32>
    %19 = vector.shape_cast %18 : vector<16x2xf32> to vector<8x2x2xf32>
    %c0_9 = arith.constant 0 : index
    %c0_10 = arith.constant 0 : index
    %c0_11 = arith.constant 0 : index
    %20 = vector.load %arg5[%c0_9, %c0_10, %c0_11] : memref<8x2x2xf32, #tpu.memory_space<vmem>>, vector<8x2x2xf32>
    tpu.vector_store %arg5[%c0_9, %c0_10, %c0_11], %19 {strides = array<i32>} : memref<8x2x2xf32, #tpu.memory_space<vmem>>, vector<8x2x2xf32>,
    return
  }
  func.func @transform_0(%arg0: i32) -> (i32, i32) {
    %c0_i32 = arith.constant 0 : i32
    %c0_i32_0 = arith.constant 0 : i32
    return %c0_i32, %arg0 : i32, i32
  }
  func.func @transform_1(%arg0: i32) -> (i32, i32) {
    %c0_i32 = arith.constant 0 : i32
    %c0_i32_0 = arith.constant 0 : i32
    %c0_i32_1 = arith.constant 0 : i32
    return %c0_i32, %c0_i32_0 : i32, i32
  }
  func.func @transform_2(%arg0: i32) -> (i32, i32) {
    %c0_i32 = arith.constant 0 : i32
    %c0_i32_0 = arith.constant 0 : i32
    %c0_i32_1 = arith.constant 0 : i32
    return %c0_i32, %c0_i32_0 : i32, i32
  }
  func.func @transform_3(%arg0: i32) -> (i32, i32) {
    %c0_i32 = arith.constant 0 : i32
    %c0_i32_0 = arith.constant 0 : i32
    %c0_i32_1 = arith.constant 0 : i32
    return %c0_i32, %c0_i32_0 : i32, i32
  }
  func.func @transform_4(%arg0: i32) -> (i32, i32, i32) {
    %c0_i32 = arith.constant 0 : i32
    %c0_i32_0 = arith.constant 0 : i32
    %c0_i32_1 = arith.constant 0 : i32
    return %c0_i32, %arg0, %c0_i32_0 : i32, i32, i32
  }
}

</mosaic_0001>

<llo_original>
// kernel: tpu_custom_call.1
$region0: #{tpu_custom_call.1}
  #allocation0 [shape = 'u32[]', space=smem, size = 0x4, offset = 0x4, fixed_abs, tag = 'smem constant byte address 0x4 - core index']
  #allocation1 [shape = 'u32[144,128]{1,0:T(1,128)}', space=vmem, size = 0x12000, scoped, tag = 'internal scratch']
  %s0 = inlined_call_operand.vmem [shape: f32[4,512], index: 0, kind: input, shape index: {}]
  %s1 = inlined_call_operand.vmem [shape: f32[8,4], index: 1, kind: input, shape index: {}]
  %s2 = inlined_call_operand.vmem [shape: f32[8,1], index: 2, kind: input, shape index: {}]
  %s3 = inlined_call_operand.vmem [shape: f32[256,3], index: 3, kind: input, shape index: {}]
  %s4 = inlined_call_operand.vmem [shape: f32[8,2,2], index: 4, kind: output, shape index: {}]
  %s5 = sld [smem:[#allocation0]]
  $region26: #{tpu_custom_call.1} parent=0
    _
  %s7 = ssub.s32 1, %s5
  %s8 = scalar_select 0, %s7, %s5
  // Predicated region
  $region2: #{tpu_custom_call.1} parent=0 // pred_check
    _
  $region3: #{tpu_custom_call.1} parent=0 // pred_check_branch
    %10 = sbr.rel (0) target = $region5
  $region4: #{tpu_custom_call.1} parent=0 // pred_region
    _
  $region5: #{tpu_custom_call.1} parent=0 // pred_fallthru
    _
  // Predicated region
  $region6: #{tpu_custom_call.1} parent=0 // pred_check
    _
  $region7: #{tpu_custom_call.1} parent=0 // pred_check_branch
    %12 = sbr.rel (0) target = $region9
  $region8: #{tpu_custom_call.1} parent=0 // pred_region
    _
  $region9: #{tpu_custom_call.1} parent=0 // pred_fallthru
    _
  // Predicated region
  $region10: #{tpu_custom_call.1} parent=0 // pred_check
    _
  $region11: #{tpu_custom_call.1} parent=0 // pred_check_branch
    %14 = sbr.rel (0) target = $region13
  $region12: #{tpu_custom_call.1} parent=0 // pred_region
    _
  $region13: #{tpu_custom_call.1} parent=0 // pred_fallthru
    _
  // Predicated region
  $region14: #{tpu_custom_call.1} parent=0 // pred_check
    _
  $region15: #{tpu_custom_call.1} parent=0 // pred_check_branch
    %16 = sbr.rel (0) target = $region17
  $region16: #{tpu_custom_call.1} parent=0 // pred_region
    _
  $region17: #{tpu_custom_call.1} parent=0 // pred_fallthru
    _
  %v17 = vld [vmem:[%s0] sm:$0xff]
  %v18 = vld [vmem:[%s0 + $0x8] sm:$0xff]
  %v19 = vld [vmem:[%s1] sm:$0xff]
  %v20 = vld [vmem:[%s2] sm:$0xff]
  %22 = vset.pattern.permute.xlu0 0
  %23 = vperm.xlu0 %22, %v20
  %v24 = vpop.permute.xlu0 %23
  %v28 = vcombine.high %v17, %v17
  %v29 = vcombine.high %v18, %v18
  %vm30 = vcmask 31744
  %v32 = vsel %vm30, %v19, 0
  %vm34 = vcmask 1043456
  %v35 = vsel %vm34, %v17, 0
  %v37 = vsel %vm34, %v28, 0
  %v39 = vsel %vm34, %v18, 0
  %v41 = vsel %vm34, %v29, 0
  %43 = vmatprep.subr.mxu0 %v37
  %44 = vmatpush1.msra.mxu0 %v35
  %45 = vmatprep.subr.mxu0 0.0
  %46 = vmatpush1.msra.mxu0 0.0
  %47 = vmatprep.subr.mxu0 0.0
  %48 = vmatpush1.msra.mxu0 0.0
  %49 = vmatprep.subr.mxu0 0.0
  %50 = vmatpush1.msra.mxu0 0.0
  %51 = vmatprep.subr.mxu0 0.0
  %52 = vmatpush1.msra.mxu0 0.0
  %53 = vmatprep.subr.mxu0 0.0
  %54 = vmatpush1.msra.mxu0 0.0
  %55 = vmatprep.subr.mxu0 0.0
  %56 = vmatpush1.msra.mxu0 0.0
  %57 = vmatprep.subr.mxu0 0.0
  %58 = vmatpush1.msra.mxu0 0.0
  %59 = vmatprep.subr.mxu0 0.0
  %60 = vmatpush1.msra.mxu0 0.0
  %61 = vmatprep.subr.mxu0 0.0
  %62 = vmatpush1.msra.mxu0 0.0
  %63 = vmatprep.subr.mxu0 0.0
  %64 = vmatpush1.msra.mxu0 0.0
  %65 = vmatprep.subr.mxu0 0.0
  %66 = vmatpush1.msra.mxu0 0.0
  %67 = vmatprep.subr.mxu0 0.0
  %68 = vmatpush1.msra.mxu0 0.0
  %69 = vmatprep.subr.mxu0 0.0
  %70 = vmatpush1.msra.mxu0 0.0
  %71 = vmatprep.subr.mxu0 0.0
  %72 = vmatpush1.msra.mxu0 0.0
  %73 = vmatprep.subr.mxu0 0.0
  %74 = vmatpush1.msra.mxu0 0.0
  %75 = vmatprep.subr.mxu0 0.0
  %76 = vmatpush1.msra.mxu0 0.0
  %77 = vmatprep.subr.mxu0 0.0
  %78 = vmatpush1.msra.mxu0 0.0
  %79 = vmatprep.subr.mxu0 0.0
  %80 = vmatpush1.msra.mxu0 0.0
  %81 = vmatprep.subr.mxu0 0.0
  %82 = vmatpush1.msra.mxu0 0.0
  %83 = vmatprep.subr.mxu0 0.0
  %84 = vmatpush1.msra.mxu0 0.0
  %85 = vmatprep.subr.mxu0 0.0
  %86 = vmatpush1.msra.mxu0 0.0
  %87 = vmatprep.subr.mxu0 0.0
  %88 = vmatpush1.msra.mxu0 0.0
  %89 = vmatprep.subr.mxu0 0.0
  %90 = vmatpush1.msra.mxu0 0.0
  %91 = vmatprep.subr.mxu0 0.0
  %92 = vmatpush1.msra.mxu0 0.0
  %93 = vmatprep.subr.mxu0 0.0
  %94 = vmatpush1.msra.mxu0 0.0
  %95 = vmatprep.subr.mxu0 0.0
  %96 = vmatpush1.msra.mxu0 0.0
  %97 = vmatprep.subr.mxu0 0.0
  %98 = vmatpush1.msra.mxu0 0.0
  %99 = vmatprep.subr.mxu0 0.0
  %100 = vmatpush1.msra.mxu0 0.0
  %101 = vmatprep.subr.mxu0 0.0
  %102 = vmatpush1.msra.mxu0 0.0
  %103 = vmatprep.subr.mxu0 0.0
  %104 = vmatpush1.msra.mxu0 0.0
  %105 = vmatprep.subr.mxu0 0.0
  %106 = vmatpush1.msra.mxu0 0.0
  %107 = vmatprep.mubr.f32.mxu0 0.0
  %108 = vmatmul.mubr.f32.gmra.mrb[0].mxu0 %v32
  %v109 = vpop.f32.mrb[0].mxu0
  %v110 = vadd.f32 %v24, %v109
  %v111 = vpop.f32.mrb[0].mxu0
  %v112 = vadd.f32 %v24, %v111
  %113 = vdwg.mxu0
  %114 = vmatprep.subr.mxu0 %v41
  %115 = vmatpush1.msra.mxu0 %v39
  %116 = vmatprep.subr.mxu0 0.0
  %117 = vmatpush1.msra.mxu0 0.0
  %118 = vmatprep.subr.mxu0 0.0
  %119 = vmatpush1.msra.mxu0 0.0
  %120 = vmatprep.subr.mxu0 0.0
  %121 = vmatpush1.msra.mxu0 0.0
  %122 = vmatprep.subr.mxu0 0.0
  %123 = vmatpush1.msra.mxu0 0.0
  %124 = vmatprep.subr.mxu0 0.0
  %125 = vmatpush1.msra.mxu0 0.0
  %126 = vmatprep.subr.mxu0 0.0
  %127 = vmatpush1.msra.mxu0 0.0
  %128 = vmatprep.subr.mxu0 0.0
  %129 = vmatpush1.msra.mxu0 0.0
  %130 = vmatprep.subr.mxu0 0.0
  %131 = vmatpush1.msra.mxu0 0.0
  %132 = vmatprep.subr.mxu0 0.0
  %133 = vmatpush1.msra.mxu0 0.0
  %134 = vmatprep.subr.mxu0 0.0
  %135 = vmatpush1.msra.mxu0 0.0
  %136 = vmatprep.subr.mxu0 0.0
  %137 = vmatpush1.msra.mxu0 0.0
  %138 = vmatprep.subr.mxu0 0.0
  %139 = vmatpush1.msra.mxu0 0.0
  %140 = vmatprep.subr.mxu0 0.0
  %141 = vmatpush1.msra.mxu0 0.0
  %142 = vmatprep.subr.mxu0 0.0
  %143 = vmatpush1.msra.mxu0 0.0
  %144 = vmatprep.subr.mxu0 0.0
  %145 = vmatpush1.msra.mxu0 0.0
  %146 = vmatprep.subr.mxu0 0.0
  %147 = vmatpush1.msra.mxu0 0.0
  %148 = vmatprep.subr.mxu0 0.0
  %149 = vmatpush1.msra.mxu0 0.0
  %150 = vmatprep.subr.mxu0 0.0
  %151 = vmatpush1.msra.mxu0 0.0
  %152 = vmatprep.subr.mxu0 0.0
  %153 = vmatpush1.msra.mxu0 0.0
  %154 = vmatprep.subr.mxu0 0.0
  %155 = vmatpush1.msra.mxu0 0.0
  %156 = vmatprep.subr.mxu0 0.0
  %157 = vmatpush1.msra.mxu0 0.0
  %158 = vmatprep.subr.mxu0 0.0
  %159 = vmatpush1.msra.mxu0 0.0
  %160 = vmatprep.subr.mxu0 0.0
  %161 = vmatpush1.msra.mxu0 0.0
  %162 = vmatprep.subr.mxu0 0.0
  %163 = vmatpush1.msra.mxu0 0.0
  %164 = vmatprep.subr.mxu0 0.0
  %165 = vmatpush1.msra.mxu0 0.0
  %166 = vmatprep.subr.mxu0 0.0
  %167 = vmatpush1.msra.mxu0 0.0
  %168 = vmatprep.subr.mxu0 0.0
  %169 = vmatpush1.msra.mxu0 0.0
  %170 = vmatprep.subr.mxu0 0.0
  %171 = vmatpush1.msra.mxu0 0.0
  %172 = vmatprep.subr.mxu0 0.0
  %173 = vmatpush1.msra.mxu0 0.0
  %174 = vmatprep.subr.mxu0 0.0
  %175 = vmatpush1.msra.mxu0 0.0
  %176 = vmatprep.subr.mxu0 0.0
  %177 = vmatpush1.msra.mxu0 0.0
  %178 = vmatprep.mubr.f32.mxu0 0.0
  %179 = vmatmul.mubr.f32.gmra.mrb[0].mxu0 %v32
  %v180 = vpop.f32.mrb[0].mxu0
  %v181 = vadd.f32 %v24, %v180
  %v182 = vpop.f32.mrb[0].mxu0
  %v183 = vadd.f32 %v24, %v182
  %184 = vdwg.mxu0
  %v185 = vcombine.high %v110, 0.0
  %v187 = vunpack.c.l.s4 1983009808
  %v188 = vunpack.c.0.s8 %v187
  %v189 = vlaneseq
  %v190 = vshrl.u32 %v189, 7
  %v191 = vsub.s32 %v188, %v190
  %v192 = vrot.slane %v110, %v191
  %v194 = vunpack.c.l.s4 1983009808
  %v195 = vunpack.c.0.s8 %v194
  %v196 = vlaneseq
  %v197 = vshrl.u32 %v196, 7
  %v198 = vsub.s32 %v195, %v197
  %v199 = vrot.slane %v185, %v198
  %v200 = vcombine.high %v181, 0.0
  %v202 = vunpack.c.l.s4 1983009808
  %v203 = vunpack.c.0.s8 %v202
  %v204 = vlaneseq
  %v205 = vshrl.u32 %v204, 7
  %v206 = vsub.s32 %v203, %v205
  %v207 = vrot.slane %v181, %v206
  %v209 = vunpack.c.l.s4 1983009808
  %v210 = vunpack.c.0.s8 %v209
  %v211 = vlaneseq
  %v212 = vshrl.u32 %v211, 7
  %v213 = vsub.s32 %v210, %v212
  %v214 = vrot.slane %v200, %v213
  %v215 = vcombine.low %v192, %v207
  %v216 = vcombine.high %v192, %v207
  %v218 = vunpack.c.l.s4 1934713408
  %v219 = vunpack.c.0.s8 %v218
  %v220 = vlaneseq
  %v221 = vshrl.u32 %v220, 7
  %v222 = vsub.s32 %v219, %v221
  %v223 = vrot.slane %v215, %v222
  %v225 = vunpack.c.l.s4 1934713408
  %v226 = vunpack.c.0.s8 %v225
  %v227 = vlaneseq
  %v228 = vshrl.u32 %v227, 7
  %v229 = vsub.s32 %v226, %v228
  %v230 = vrot.slane %v216, %v229
  %v231 = vcombine.low %v199, %v214
  %v232 = vcombine.high %v199, %v214
  %v234 = vunpack.c.l.s4 1934713408
  %v235 = vunpack.c.0.s8 %v234
  %v236 = vlaneseq
  %v237 = vshrl.u32 %v236, 7
  %v238 = vsub.s32 %v235, %v237
  %v239 = vrot.slane %v231, %v238
  %v241 = vunpack.c.l.s4 1934713408
  %v242 = vunpack.c.0.s8 %v241
  %v243 = vlaneseq
  %v244 = vshrl.u32 %v243, 7
  %v245 = vsub.s32 %v242, %v244
  %v246 = vrot.slane %v232, %v245
  %v247 = vcombine.high %v223, 0.0
  %v248 = vcombine.high %v230, 0.0
  %v249 = vcombine.high %v239, 0.0
  %v250 = vcombine.high %v246, 0.0
  %v251 = vcombine.high %v112, 0.0
  %v253 = vunpack.c.l.s4 1983009808
  %v254 = vunpack.c.0.s8 %v253
  %v255 = vlaneseq
  %v256 = vshrl.u32 %v255, 7
  %v257 = vsub.s32 %v254, %v256
  %v258 = vrot.slane %v112, %v257
  %v260 = vunpack.c.l.s4 1983009808
  %v261 = vunpack.c.0.s8 %v260
  %v262 = vlaneseq
  %v263 = vshrl.u32 %v262, 7
  %v264 = vsub.s32 %v261, %v263
  %v265 = vrot.slane %v251, %v264
  %v266 = vcombine.high %v183, 0.0
  %v268 = vunpack.c.l.s4 1983009808
  %v269 = vunpack.c.0.s8 %v268
  %v270 = vlaneseq
  %v271 = vshrl.u32 %v270, 7
  %v272 = vsub.s32 %v269, %v271
  %v273 = vrot.slane %v183, %v272
  %v275 = vunpack.c.l.s4 1983009808
  %v276 = vunpack.c.0.s8 %v275
  %v277 = vlaneseq
  %v278 = vshrl.u32 %v277, 7
  %v279 = vsub.s32 %v276, %v278
  %v280 = vrot.slane %v266, %v279
  %v281 = vcombine.low %v258, %v273
  %v282 = vcombine.high %v258, %v273
  %v284 = vunpack.c.l.s4 1934713408
  %v285 = vunpack.c.0.s8 %v284
  %v286 = vlaneseq
  %v287 = vshrl.u32 %v286, 7
  %v288 = vsub.s32 %v285, %v287
  %v289 = vrot.slane %v281, %v288
  %v291 = vunpack.c.l.s4 1934713408
  %v292 = vunpack.c.0.s8 %v291
  %v293 = vlaneseq
  %v294 = vshrl.u32 %v293, 7
  %v295 = vsub.s32 %v292, %v294
  %v296 = vrot.slane %v282, %v295
  %v297 = vcombine.low %v265, %v280
  %v298 = vcombine.high %v265, %v280
  %v300 = vunpack.c.l.s4 1934713408
  %v301 = vunpack.c.0.s8 %v300
  %v302 = vlaneseq
  %v303 = vshrl.u32 %v302, 7
  %v304 = vsub.s32 %v301, %v303
  %v305 = vrot.slane %v297, %v304
  %v307 = vunpack.c.l.s4 1934713408
  %v308 = vunpack.c.0.s8 %v307
  %v309 = vlaneseq
  %v310 = vshrl.u32 %v309, 7
  %v311 = vsub.s32 %v308, %v310
  %v312 = vrot.slane %v298, %v311
  %v313 = vcombine.high %v289, 0.0
  %v314 = vcombine.high %v296, 0.0
  %v315 = vcombine.high %v305, 0.0
  %v316 = vcombine.high %v312, 0.0
  %vm317 = vcmask 1041408
  %v318 = vsel %vm317, %v223, -inf
  %v319 = vsel %vm317, %v289, -inf
  %v320 = vmax.f32 %v318, %v319
  %321 = vmax.xlane.f32.xlu0 %v320
  %v322 = vpop.xlane.xlu0 %321
  %v323 = vsel %vm317, %v247, -inf
  %v324 = vsel %vm317, %v313, -inf
  %v325 = vmax.f32 %v323, %v324
  %326 = vmax.xlane.f32.xlu0 %v325
  %v327 = vpop.xlane.xlu0 %326
  %v328 = vsel %vm317, %v230, -inf
  %v329 = vsel %vm317, %v296, -inf
  %v330 = vmax.f32 %v328, %v329
  %331 = vmax.xlane.f32.xlu0 %v330
  %v332 = vpop.xlane.xlu0 %331
  %v333 = vsel %vm317, %v248, -inf
  %v334 = vsel %vm317, %v314, -inf
  %v335 = vmax.f32 %v333, %v334
  %336 = vmax.xlane.f32.xlu0 %v335
  %v337 = vpop.xlane.xlu0 %336
  %v338 = vsel %vm317, %v239, -inf
  %v339 = vsel %vm317, %v305, -inf
  %v340 = vmax.f32 %v338, %v339
  %341 = vmax.xlane.f32.xlu0 %v340
  %v342 = vpop.xlane.xlu0 %341
  %v343 = vsel %vm317, %v249, -inf
  %v344 = vsel %vm317, %v315, -inf
  %v345 = vmax.f32 %v343, %v344
  %346 = vmax.xlane.f32.xlu0 %v345
  %v347 = vpop.xlane.xlu0 %346
  %v348 = vsel %vm317, %v246, -inf
  %v349 = vsel %vm317, %v312, -inf
  %v350 = vmax.f32 %v348, %v349
  %351 = vmax.xlane.f32.xlu0 %v350
  %v352 = vpop.xlane.xlu0 %351
  %v353 = vsel %vm317, %v250, -inf
  %v354 = vsel %vm317, %v316, -inf
  %v355 = vmax.f32 %v353, %v354
  %356 = vmax.xlane.f32.xlu0 %v355
  %v357 = vpop.xlane.xlu0 %356
  %v358 = vsub.f32 %v223, %v322
  %v359 = vsub.f32 %v289, %v322
  %v360 = vsub.f32 %v247, %v327
  %v361 = vsub.f32 %v313, %v327
  %v362 = vsub.f32 %v230, %v332
  %v363 = vsub.f32 %v296, %v332
  %v364 = vsub.f32 %v248, %v337
  %v365 = vsub.f32 %v314, %v337
  %v366 = vsub.f32 %v239, %v342
  %v367 = vsub.f32 %v305, %v342
  %v368 = vsub.f32 %v249, %v347
  %v369 = vsub.f32 %v315, %v347
  %v370 = vsub.f32 %v246, %v352
  %v371 = vsub.f32 %v312, %v352
  %v372 = vsub.f32 %v250, %v357
  %v373 = vsub.f32 %v316, %v357
  %v374 = vmul.f32 %v358, 1.442695
  %v375 = vpow.pop %v374
  %v376 = vmul.f32 %v359, 1.442695
  %v377 = vpow.pop %v376
  %v378 = vmul.f32 %v360, 1.442695
  %v379 = vpow.pop %v378
  %v380 = vmul.f32 %v361, 1.442695
  %v381 = vpow.pop %v380
  %v382 = vmul.f32 %v362, 1.442695
  %v383 = vpow.pop %v382
  %v384 = vmul.f32 %v363, 1.442695
  %v385 = vpow.pop %v384
  %v386 = vmul.f32 %v364, 1.442695
  %v387 = vpow.pop %v386
  %v388 = vmul.f32 %v365, 1.442695
  %v389 = vpow.pop %v388
  %v390 = vmul.f32 %v366, 1.442695
  %v391 = vpow.pop %v390
  %v392 = vmul.f32 %v367, 1.442695
  %v393 = vpow.pop %v392
  %v394 = vmul.f32 %v368, 1.442695
  %v395 = vpow.pop %v394
  %v396 = vmul.f32 %v369, 1.442695
  %v397 = vpow.pop %v396
  %v398 = vmul.f32 %v370, 1.442695
  %v399 = vpow.pop %v398
  %v400 = vmul.f32 %v371, 1.442695
  %v401 = vpow.pop %v400
  %v402 = vmul.f32 %v372, 1.442695
  %v403 = vpow.pop %v402
  %v404 = vmul.f32 %v373, 1.442695
  %v405 = vpow.pop %v404
  %v422 = vcombine.low %v375, %v377
  %v424 = vunpack.c.l.s4 1983009808
  %v425 = vunpack.c.0.s8 %v424
  %v426 = vlaneseq
  %v427 = vshrl.u32 %v426, 7
  %v428 = vsub.s32 %v425, %v427
  %v429 = vrot.slane %v422, %v428
  %v430 = vcombine.low %v379, %v381
  %v432 = vunpack.c.l.s4 1983009808
  %v433 = vunpack.c.0.s8 %v432
  %v434 = vlaneseq
  %v435 = vshrl.u32 %v434, 7
  %v436 = vsub.s32 %v433, %v435
  %v437 = vrot.slane %v430, %v436
  %v438 = vcombine.low %v383, %v385
  %v440 = vunpack.c.l.s4 1983009808
  %v441 = vunpack.c.0.s8 %v440
  %v442 = vlaneseq
  %v443 = vshrl.u32 %v442, 7
  %v444 = vsub.s32 %v441, %v443
  %v445 = vrot.slane %v438, %v444
  %v446 = vcombine.low %v387, %v389
  %v448 = vunpack.c.l.s4 1983009808
  %v449 = vunpack.c.0.s8 %v448
  %v450 = vlaneseq
  %v451 = vshrl.u32 %v450, 7
  %v452 = vsub.s32 %v449, %v451
  %v453 = vrot.slane %v446, %v452
  %v454 = vcombine.low %v391, %v393
  %v456 = vunpack.c.l.s4 1983009808
  %v457 = vunpack.c.0.s8 %v456
  %v458 = vlaneseq
  %v459 = vshrl.u32 %v458, 7
  %v460 = vsub.s32 %v457, %v459
  %v461 = vrot.slane %v454, %v460
  %v462 = vcombine.low %v395, %v397
  %v464 = vunpack.c.l.s4 1983009808
  %v465 = vunpack.c.0.s8 %v464
  %v466 = vlaneseq
  %v467 = vshrl.u32 %v466, 7
  %v468 = vsub.s32 %v465, %v467
  %v469 = vrot.slane %v462, %v468
  %v470 = vcombine.low %v399, %v401
  %v472 = vunpack.c.l.s4 1983009808
  %v473 = vunpack.c.0.s8 %v472
  %v474 = vlaneseq
  %v475 = vshrl.u32 %v474, 7
  %v476 = vsub.s32 %v473, %v475
  %v477 = vrot.slane %v470, %v476
  %v478 = vcombine.low %v403, %v405
  %v480 = vunpack.c.l.s4 1983009808
  %v481 = vunpack.c.0.s8 %v480
  %v482 = vlaneseq
  %v483 = vshrl.u32 %v482, 7
  %v484 = vsub.s32 %v481, %v483
  %v485 = vrot.slane %v478, %v484
  %v486 = vld [vmem:[%s3] sm:$0xff]
  %v487 = vld [vmem:[%s3 + $0x8] sm:$0xff]
  %v488 = vld [vmem:[%s3 + $0x10] sm:$0xff]
  %v489 = vld [vmem:[%s3 + $0x18] sm:$0xff]
  %v490 = vld [vmem:[%s3 + $0x20] sm:$0xff]
  %v491 = vld [vmem:[%s3 + $0x28] sm:$0xff]
  %v492 = vld [vmem:[%s3 + $0x30] sm:$0xff]
  %v493 = vld [vmem:[%s3 + $0x38] sm:$0xff]
  %v494 = vld [vmem:[%s3 + $0x40] sm:$0xff]
  %v495 = vld [vmem:[%s3 + $0x48] sm:$0xff]
  %v496 = vld [vmem:[%s3 + $0x50] sm:$0xff]
  %v497 = vld [vmem:[%s3 + $0x58] sm:$0xff]
  %v498 = vld [vmem:[%s3 + $0x60] sm:$0xff]
  %v499 = vld [vmem:[%s3 + $0x68] sm:$0xff]
  %v500 = vld [vmem:[%s3 + $0x70] sm:$0xff]
  %v501 = vld [vmem:[%s3 + $0x78] sm:$0xff]
  %v502 = vld [vmem:[%s3 + $0x80] sm:$0xff]
  %v503 = vld [vmem:[%s3 + $0x88] sm:$0xff]
  %v504 = vld [vmem:[%s3 + $0x90] sm:$0xff]
  %v505 = vld [vmem:[%s3 + $0x98] sm:$0xff]
  %v506 = vld [vmem:[%s3 + $0xa0] sm:$0xff]
  %v507 = vld [vmem:[%s3 + $0xa8] sm:$0xff]
  %v508 = vld [vmem:[%s3 + $0xb0] sm:$0xff]
  %v509 = vld [vmem:[%s3 + $0xb8] sm:$0xff]
  %v510 = vld [vmem:[%s3 + $0xc0] sm:$0xff]
  %v511 = vld [vmem:[%s3 + $0xc8] sm:$0xff]
  %v512 = vld [vmem:[%s3 + $0xd0] sm:$0xff]
  %v513 = vld [vmem:[%s3 + $0xd8] sm:$0xff]
  %v514 = vld [vmem:[%s3 + $0xe0] sm:$0xff]
  %v515 = vld [vmem:[%s3 + $0xe8] sm:$0xff]
  %v516 = vld [vmem:[%s3 + $0xf0] sm:$0xff]
  %v517 = vld [vmem:[%s3 + $0xf8] sm:$0xff]
  %v518 = vcombine.low %v429, %v437
  %v519 = vcombine.low %v445, %v453
  %v521 = vunpack.c.l.s4 1983009808
  %v522 = vunpack.c.0.s8 %v521
  %v523 = vlaneseq
  %v524 = vshrl.u32 %v523, 7
  %v525 = vsub.s32 %v522, %v524
  %v526 = vrot.slane %v518, %v525
  %v528 = vunpack.c.l.s4 1983009808
  %v529 = vunpack.c.0.s8 %v528
  %v530 = vlaneseq
  %v531 = vshrl.u32 %v530, 7
  %v532 = vsub.s32 %v529, %v531
  %v533 = vrot.slane %v519, %v532
  %v534 = vcombine.low %v526, %v533
  %v535 = vcombine.high %v526, %v533
  %v536 = vcombine.low %v461, %v469
  %v537 = vcombine.low %v477, %v485
  %v539 = vunpack.c.l.s4 1983009808
  %v540 = vunpack.c.0.s8 %v539
  %v541 = vlaneseq
  %v542 = vshrl.u32 %v541, 7
  %v543 = vsub.s32 %v540, %v542
  %v544 = vrot.slane %v536, %v543
  %v546 = vunpack.c.l.s4 1983009808
  %v547 = vunpack.c.0.s8 %v546
  %v548 = vlaneseq
  %v549 = vshrl.u32 %v548, 7
  %v550 = vsub.s32 %v547, %v549
  %v551 = vrot.slane %v537, %v550
  %v552 = vcombine.low %v544, %v551
  %v553 = vcombine.high %v544, %v551
  %558 = vmatprep.subr.mxu0 0.0
  %559 = vmatpush1.msra.mxu0 %v486
  %560 = vmatprep.subr.mxu0 0.0
  %561 = vmatpush1.msra.mxu0 %v487
  %562 = vmatprep.subr.mxu0 0.0
  %563 = vmatpush1.msra.mxu0 %v488
  %564 = vmatprep.subr.mxu0 0.0
  %565 = vmatpush1.msra.mxu0 %v489
  %566 = vmatprep.subr.mxu0 0.0
  %567 = vmatpush1.msra.mxu0 %v490
  %568 = vmatprep.subr.mxu0 0.0
  %569 = vmatpush1.msra.mxu0 %v491
  %570 = vmatprep.subr.mxu0 0.0
  %571 = vmatpush1.msra.mxu0 %v492
  %572 = vmatprep.subr.mxu0 0.0
  %573 = vmatpush1.msra.mxu0 %v493
  %574 = vmatprep.subr.mxu0 0.0
  %575 = vmatpush1.msra.mxu0 %v494
  %576 = vmatprep.subr.mxu0 0.0
  %577 = vmatpush1.msra.mxu0 %v495
  %578 = vmatprep.subr.mxu0 0.0
  %579 = vmatpush1.msra.mxu0 %v496
  %580 = vmatprep.subr.mxu0 0.0
  %581 = vmatpush1.msra.mxu0 %v497
  %582 = vmatprep.subr.mxu0 0.0
  %583 = vmatpush1.msra.mxu0 %v498
  %584 = vmatprep.subr.mxu0 0.0
  %585 = vmatpush1.msra.mxu0 %v499
  %586 = vmatprep.subr.mxu0 0.0
  %587 = vmatpush1.msra.mxu0 %v500
  %588 = vmatprep.subr.mxu0 0.0
  %589 = vmatpush1.msra.mxu0 %v501
  %590 = vmatprep.subr.mxu0 0.0
  %591 = vmatpush1.msra.mxu0 %v502
  %592 = vmatprep.subr.mxu0 0.0
  %593 = vmatpush1.msra.mxu0 %v503
  %594 = vmatprep.subr.mxu0 0.0
  %595 = vmatpush1.msra.mxu0 %v504
  %596 = vmatprep.subr.mxu0 0.0
  %597 = vmatpush1.msra.mxu0 %v505
  %598 = vmatprep.subr.mxu0 0.0
  %599 = vmatpush1.msra.mxu0 %v506
  %600 = vmatprep.subr.mxu0 0.0
  %601 = vmatpush1.msra.mxu0 %v507
  %602 = vmatprep.subr.mxu0 0.0
  %603 = vmatpush1.msra.mxu0 %v508
  %604 = vmatprep.subr.mxu0 0.0
  %605 = vmatpush1.msra.mxu0 %v509
  %606 = vmatprep.subr.mxu0 0.0
  %607 = vmatpush1.msra.mxu0 %v510
  %608 = vmatprep.subr.mxu0 0.0
  %609 = vmatpush1.msra.mxu0 %v511
  %610 = vmatprep.subr.mxu0 0.0
  %611 = vmatpush1.msra.mxu0 %v512
  %612 = vmatprep.subr.mxu0 0.0
  %613 = vmatpush1.msra.mxu0 %v513
  %614 = vmatprep.subr.mxu0 0.0
  %615 = vmatpush1.msra.mxu0 %v514
  %616 = vmatprep.subr.mxu0 0.0
  %617 = vmatpush1.msra.mxu0 %v515
  %618 = vmatprep.subr.mxu0 0.0
  %619 = vmatpush1.msra.mxu0 %v516
  %620 = vmatprep.subr.mxu0 0.0
  %621 = vmatpush1.msra.mxu0 %v517
  %622 = vmatprep.mubr.f32.mxu0 %v535
  %623 = vmatmul.mubr.f32.gmra.mrb[0].mxu0 %v534
  %v624 = vpop.f32.mrb[0].mxu0
  %v625 = vadd.f32 0.0, %v624
  %v626 = vpop.f32.mrb[0].mxu0
  %627 = vmatprep.mubr.f32.mxu0 %v553
  %628 = vmatmul.mubr.f32.gmra.mrb[0].mxu0 %v552
  %v629 = vpop.f32.mrb[0].mxu0
  %v630 = vadd.f32 0.0, %v629
  %v631 = vpop.f32.mrb[0].mxu0
  %632 = vdwg.mxu0
  %634 = vset.pattern.permute.xlu0 2
  %635 = vperm.xlu0 %634, %v625
  %v636 = vpop.permute.xlu0 %635
  %639 = vset.pattern.permute.xlu0 2
  %640 = vperm.xlu0 %639, %v630
  %v641 = vpop.permute.xlu0 %640
  %v643 = vrcp.pop %v636
  %v644 = vmul.f32 %v625, %v643
  %v645 = vrcp.pop %v641
  %v646 = vmul.f32 %v630, %v645
  %v649 = vcombine.high %v644, %v644
  %v651 = vunpack.c.l.s4 1983009808
  %v652 = vunpack.c.0.s8 %v651
  %v653 = vlaneseq
  %v654 = vshrl.u32 %v653, 7
  %v655 = vsub.s32 %v652, %v654
  %v656 = vrot.slane %v644, %v655
  %v658 = vunpack.c.l.s4 1983009808
  %v659 = vunpack.c.0.s8 %v658
  %v660 = vlaneseq
  %v661 = vshrl.u32 %v660, 7
  %v662 = vsub.s32 %v659, %v661
  %v663 = vrot.slane %v649, %v662
  %v664 = vcombine.high %v656, %v656
  %v665 = vcombine.high %v663, %v663
  %v666 = vcombine.high %v646, %v646
  %v668 = vunpack.c.l.s4 1983009808
  %v669 = vunpack.c.0.s8 %v668
  %v670 = vlaneseq
  %v671 = vshrl.u32 %v670, 7
  %v672 = vsub.s32 %v669, %v671
  %v673 = vrot.slane %v646, %v672
  %v675 = vunpack.c.l.s4 1983009808
  %v676 = vunpack.c.0.s8 %v675
  %v677 = vlaneseq
  %v678 = vshrl.u32 %v677, 7
  %v679 = vsub.s32 %v676, %v678
  %v680 = vrot.slane %v666, %v679
  %v681 = vcombine.high %v673, %v673
  %v682 = vcombine.high %v680, %v680
  %vm691 = vcmask 9216
  %692 = vst.msk [vmem:[%s4] sm:$0x3] %vm691, %v656
  %693 = vst.msk [vmem:[%s4 + $0x2] sm:$0x3] %vm691, %v664
  %694 = vst.msk [vmem:[%s4 + $0x4] sm:$0x3] %vm691, %v663
  %695 = vst.msk [vmem:[%s4 + $0x6] sm:$0x3] %vm691, %v665
  %696 = vst.msk [vmem:[%s4 + $0x8] sm:$0x3] %vm691, %v673
  %697 = vst.msk [vmem:[%s4 + $0xa] sm:$0x3] %vm691, %v681
  %698 = vst.msk [vmem:[%s4 + $0xc] sm:$0x3] %vm691, %v680
  %699 = vst.msk [vmem:[%s4 + $0xe] sm:$0x3] %vm691, %v682
  // Predicated region
  $region18: #{tpu_custom_call.1} parent=0 // pred_check
    _
  $region19: #{tpu_custom_call.1} parent=0 // pred_check_branch
    %701 = sbr.rel (0) target = $region21
  $region20: #{tpu_custom_call.1} parent=0 // pred_region
    _
  $region21: #{tpu_custom_call.1} parent=0 // pred_fallthru
    _
  // Predicated region
  $region22: #{tpu_custom_call.1} parent=0 // pred_check
    _
  $region23: #{tpu_custom_call.1} parent=0 // pred_check_branch
    %703 = sbr.rel (0) target = $region25
  $region24: #{tpu_custom_call.1} parent=0 // pred_region
    _
  $region25: #{tpu_custom_call.1} parent=0 // pred_fallthru
    _

</llo_original>
